<compile_context>
chip_gen: v6e
topology: v6e:2x2x1
jax: 0.10.0
libtpu: 0.0.40
codegen_flags: <defaults>
</compile_context>

<pallas_src>
import functools

import jax
import jax.numpy as jnp
from jax import lax
from jax.experimental import pallas as pl
from jax.experimental.pallas import tpu as pltpu


def _round_up(x, m):
    return (x + m - 1) // m * m


_VMEM_LIMIT = 32 * 1024 * 1024  # <= physical VMEM on v5e/v6e (128 MiB) and v7x (64 MiB)


# ----------------------------------------------------------------------------
# Kernel 1: row-tiled dense projection  Y = X @ W  (+ optional * norm + bias)
#   X is cast to bf16 in-register (no-op when already bf16); W is bf16 and held
#   resident; the MXU accumulates in f32 via preferred_element_type.
# ----------------------------------------------------------------------------
def _project_kernel(x_ref, w_ref, n_ref, b_ref, o_ref, *, epilogue):
    x = x_ref[...].astype(jnp.bfloat16)
    y = jnp.dot(x, w_ref[...], preferred_element_type=jnp.float32)
    if epilogue:
        y = y * n_ref[...] + b_ref[...]
    o_ref[...] = y.astype(o_ref.dtype)


def _project(x_p, w_p, norm_p, b_p, *, tr, epilogue, out_dtype):
    n_pad, fin_p = x_p.shape
    fout_p = w_p.shape[1]
    kernel = functools.partial(_project_kernel, epilogue=epilogue)
    # TODO(synk): k-tile the fin_p reduction if the (fin_p, fout_p) bf16 weight
    # block ever outgrows VMEM (fine up to ~2k x 2k at the 32 MiB scoped limit).
    return pl.pallas_call(
        kernel,
        out_shape=jax.ShapeDtypeStruct((n_pad, fout_p), out_dtype),
        grid_spec=pltpu.PrefetchScalarGridSpec(
            num_scalar_prefetch=0,
            grid=(n_pad // tr,),
            in_specs=[
                pl.BlockSpec((tr, fin_p), lambda i: (i, 0)),       # X rows
                pl.BlockSpec((fin_p, fout_p), lambda i: (0, 0)),   # W bf16 (resident)
                pl.BlockSpec((tr, 1), lambda i: (i, 0)),           # norm rows (dst)
                pl.BlockSpec((1, fout_p), lambda i: (0, 0)),       # bias
            ],
            out_specs=pl.BlockSpec((tr, fout_p), lambda i: (i, 0)),
        ),
        compiler_params=pltpu.CompilerParams(
            dimension_semantics=("parallel",),
            vmem_limit_bytes=_VMEM_LIMIT),
    )(x_p, w_p, norm_p, b_p)


# ----------------------------------------------------------------------------
# Kernel 2: tiled aggregation  Z = A @ H, accumulating directly into the
#   resident f32 output block (reduction axis k last, "arbitrary").
#   A is int8 {0,1} in HBM, cast to bf16 in-register right before the dot.
#   H is either fully VMEM-resident (constant index, sliced by k) or streamed.
#   dst_epilogue folds  * norm_dst + bias  into the last k step.
# ----------------------------------------------------------------------------
def _aggregate_kernel(a_ref, h_ref, nd_ref, b_ref, o_ref,
                      *, tk, h_resident, dst_epilogue):
    k = pl.program_id(1)

    @pl.when(k == 0)
    def _():
        o_ref[...] = jnp.zeros_like(o_ref)

    a = a_ref[...].astype(jnp.bfloat16)            # int8 {0,1} -> bf16, exact
    if h_resident:
        start = pl.multiple_of(k * tk, tk)
        h = h_ref[pl.ds(start, tk), :]             # slice the resident bf16 H
    else:
        h = h_ref[...]                             # streamed bf16 tile
    o_ref[...] += jnp.dot(a, h, preferred_element_type=jnp.float32)

    if dst_epilogue:
        @pl.when(k == pl.num_programs(1) - 1)
        def _():
            o_ref[...] = o_ref[...] * nd_ref[...] + b_ref[...]


def _aggregate(adj_q, h_p, norm_p, b_p, *, tm, tk, dst_epilogue, resident):
    n_pad = adj_q.shape[0]
    f_p = h_p.shape[1]
    if not dst_epilogue:
        # bias is unused in this configuration; pass a width-matched dummy so
        # the BlockSpec is always consistent with the array shape.
        b_p = jnp.zeros((1, f_p), jnp.float32)
    kernel = functools.partial(_aggregate_kernel, tk=tk, h_resident=resident,
                               dst_epilogue=dst_epilogue)
    if resident:
        h_spec = pl.BlockSpec((n_pad, f_p), lambda i, k: (0, 0))   # fetched once
    else:
        h_spec = pl.BlockSpec((tk, f_p), lambda i, k: (k, 0))
    return pl.pallas_call(
        kernel,
        out_shape=jax.ShapeDtypeStruct((n_pad, f_p), jnp.float32),
        grid_spec=pltpu.PrefetchScalarGridSpec(
            num_scalar_prefetch=0,
            grid=(n_pad // tm, n_pad // tk),        # reduction (src) axis last
            in_specs=[
                pl.BlockSpec((tm, tk), lambda i, k: (i, k)),   # adjacency int8
                h_spec,                                        # H (bf16)
                pl.BlockSpec((tm, 1), lambda i, k: (i, 0)),    # norm (dst rows)
                pl.BlockSpec((1, f_p), lambda i, k: (0, 0)),   # bias
            ],
            out_specs=pl.BlockSpec((tm, f_p), lambda i, k: (i, 0)),
        ),
        compiler_params=pltpu.CompilerParams(
            dimension_semantics=("parallel", "arbitrary"),
            vmem_limit_bytes=_VMEM_LIMIT),
    )(adj_q, h_p, norm_p, b_p)


# ----------------------------------------------------------------------------
# Public wrapper: GraphConv forward
# ----------------------------------------------------------------------------
def graph_conv(adj, feat, weight, bias, *, node_tile=512,
               resident_h_budget_bytes=4 * 1024 * 1024):
    """GraphConv forward (activation=None).

    adj:    (N, N) dense 0/1 adjacency with adj[dst, src] = 1 iff edge src->dst.
            Unweighted graphs only: the adjacency is quantized to int8 (0/1 exact).
    feat:   (N, F_in); weight: (F_in, F_out); bias: (F_out,).
    """
    n, in_feats = feat.shape
    out_feats = weight.shape[1]

    fin_p = _round_up(in_feats, 128)
    fout_p = _round_up(out_feats, 128)

    # Node-tile geometry: multiple of 128; keep >=2 dst tiles when possible so
    # the "parallel" dst axis can be balanced across both v7x TensorCores.
    n128 = _round_up(n, 128)
    tm = min(_round_up(node_tile, 128), n128)
    if n128 >= 256:
        tm = min(tm, _round_up(n128 // 2, 128))
    n_pad = _round_up(n, tm)
    tk = tm

    # --- adjacency: single pad+quantize pass to int8 (0/1 is exact) ----------
    # TODO(synk): accept a caller-supplied int8 adjacency + degree vector to
    # remove this O(N^2) preprocessing pass entirely.
    if n_pad == n:
        adj_q = adj.astype(jnp.int8)
    else:
        adj_q = jnp.zeros((n_pad, n_pad), jnp.int8).at[:n, :n].set(
            adj.astype(jnp.int8))

    # Degrees from the already-quantized copy (reads 1 B/elem, not 4).
    deg = jnp.sum(adj_q.astype(jnp.float32), axis=1, keepdims=True)   # (n_pad, 1)
    norm_p = lax.rsqrt(jnp.maximum(deg, 1.0))    # padded rows: deg=0 -> norm=1 (sliced off)

    # --- features: fold the source-side norm into the single pad/cast pass ---
    feat_n = feat.astype(jnp.float32) * norm_p[:n]
    if n_pad == n and fin_p == in_feats:
        feat_p = feat_n.astype(jnp.bfloat16)
    else:
        feat_p = jnp.zeros((n_pad, fin_p), jnp.bfloat16).at[:n, :in_feats].set(
            feat_n.astype(jnp.bfloat16))

    # --- weight / bias (bf16 W: MXU-rate matmul, half the VMEM residency) ----
    if fin_p == in_feats and fout_p == out_feats:
        w_p = weight.astype(jnp.bfloat16)
        b_p = bias.astype(jnp.float32).reshape(1, fout_p)
    else:
        w_p = jnp.zeros((fin_p, fout_p), jnp.bfloat16).at[
            :in_feats, :out_feats].set(weight.astype(jnp.bfloat16))
        b_p = jnp.zeros((1, fout_p), jnp.float32).at[0, :out_feats].set(
            bias.astype(jnp.float32))

    def _resident(f_p):
        return n_pad * f_p * 2 <= resident_h_budget_bytes   # bf16, one buffer

    # Choose the branch on the *padded* widths (what the aggregation streams).
    project_first = (fin_p > fout_p) if fin_p != fout_p else (in_feats > out_feats)

    if project_first:
        # project once (bf16 out), then aggregate over in-edges with dst epilogue
        h = _project(feat_p, w_p, norm_p, b_p, tr=tm, epilogue=False,
                     out_dtype=jnp.bfloat16)                        # (n_pad, fout_p)
        out_p = _aggregate(adj_q, h, norm_p, b_p, tm=tm, tk=tk,
                           dst_epilogue=True, resident=_resident(fout_p))
    else:
        # aggregate first (src norm already folded into feat_p), then project
        agg = _aggregate(adj_q, feat_p, norm_p, b_p, tm=tm, tk=tk,
                         dst_epilogue=False, resident=_resident(fin_p))
        out_p = _project(agg, w_p, norm_p, b_p, tr=tm, epilogue=True,
                         out_dtype=jnp.float32)

    return out_p[:n, :out_feats]


def graph_conv_ref(adj, feat, weight, bias):
    """Pure-JAX reference matching the PyTorch/DGL semantics (high precision)."""
    hp = lax.Precision.HIGHEST
    deg = jnp.sum(adj, axis=1, keepdims=True)
    norm = jnp.power(jnp.maximum(deg, 1.0), -0.5)
    f = feat * norm
    if feat.shape[1] > weight.shape[1]:
        rst = jnp.dot(adj, jnp.dot(f, weight, precision=hp), precision=hp)
    else:
        rst = jnp.dot(jnp.dot(adj, f, precision=hp), weight, precision=hp)
    return rst * norm + bias.reshape(1, -1)


if __name__ == "__main__":
    key = jax.random.PRNGKey(0)

    # (N, F_in, F_out, force_streamed_H):
    #   case 1 -> project-then-aggregate, resident H
    #   case 2 -> aggregate-then-project, ragged-N padding path, resident H
    #   case 3 -> aggregate-then-project with the streamed-H path forced
    cases = [(256, 128, 16, False), (200, 16, 64, False), (256, 32, 32, True)]
    for n, in_feats, out_feats, force_stream in cases:
        key, k_adj, k_feat, k_w, k_b = jax.random.split(key, 5)

        adj = (jax.random.uniform(k_adj, (n, n)) < 0.3).astype(jnp.float32)
        feat = jax.random.normal(k_feat, (n, in_feats), dtype=jnp.float32)
        weight = jax.random.normal(k_w, (in_feats, out_feats), dtype=jnp.float32) * 0.1
        bias = jax.random.normal(k_b, (out_feats,), dtype=jnp.float32) * 0.1

        budget = 0 if force_stream else 4 * 1024 * 1024
        out = graph_conv(adj, feat, weight, bias,
                         resident_h_budget_bytes=budget)
        out = jax.block_until_ready(out)

        ref = graph_conv_ref(adj, feat, weight, bias)
        assert out.shape == (n, out_feats)
        assert jnp.allclose(out, ref, atol=2e-2, rtol=2e-2), \
            f"mismatch vs reference for case {(n, in_feats, out_feats)}"

    print("KERNEL_OK")
</pallas_src>

<mosaic_0001>
module attributes {stable_mosaic.version = 11 : i64} {
  func.func @_project_kernel(%arg0: i32, %arg1: memref<128x128xbf16, #tpu.memory_space<vmem>>, %arg2: memref<128x128xbf16, #tpu.memory_space<vmem>>, %arg3: memref<128x1xf32, #tpu.memory_space<vmem>>, %arg4: memref<1x128xf32, #tpu.memory_space<vmem>>, %arg5: memref<128x128xbf16, #tpu.memory_space<vmem>>) attributes {dimension_semantics = [#tpu.dimension_semantics<parallel>], iteration_bounds = array<i64: 2>, scalar_prefetch = 0 : i64, scratch_operands = 0 : i64, tpu.core_type = #tpu.core_type<tc>, window_params = [{transform_indices = @transform_0, window_bounds = array<i64: 128, 128>}, {pipeline_mode = #tpu.pipeline_mode<synchronous>, transform_indices = @transform_1, window_bounds = array<i64: 128, 128>}, {transform_indices = @transform_2, window_bounds = array<i64: 128, 1>}, {pipeline_mode = #tpu.pipeline_mode<synchronous>, transform_indices = @transform_3, window_bounds = array<i64: 1, 128>}, {transform_indices = @transform_4, window_bounds = array<i64: 128, 128>}]} {
    %c0 = arith.constant 0 : index
    %c0_0 = arith.constant 0 : index
    %0 = vector.load %arg1[%c0, %c0_0] : memref<128x128xbf16, #tpu.memory_space<vmem>>, vector<128x128xbf16>
    %c0_1 = arith.constant 0 : index
    %c0_2 = arith.constant 0 : index
    %1 = vector.load %arg2[%c0_1, %c0_2] : memref<128x128xbf16, #tpu.memory_space<vmem>>, vector<128x128xbf16>
    %cst = arith.constant dense<0.000000e+00> : vector<128x128xf32>
    %2 = tpu.matmul %0, %1, %cst {dimension_numbers = #tpu.dot_dimension_numbers<[1], [0], [0], [1], [0, 0, 1, 1], [], []>} : vector<128x128xbf16>, vector<128x128xbf16>, vector<128x128xf32> -> vector<128x128xf32>
    %3 = arith.truncf %2 : vector<128x128xf32> to vector<128x128xbf16>
    %c0_3 = arith.constant 0 : index
    %c0_4 = arith.constant 0 : index
    %4 = vector.load %arg5[%c0_3, %c0_4] : memref<128x128xbf16, #tpu.memory_space<vmem>>, vector<128x128xbf16>
    tpu.vector_store %arg5[%c0_3, %c0_4], %3 {strides = array<i32>} : memref<128x128xbf16, #tpu.memory_space<vmem>>, vector<128x128xbf16>,
    return
  }
  func.func @transform_0(%arg0: i32) -> (i32, i32) {
    %c0_i32 = arith.constant 0 : i32
    %c0_i32_0 = arith.constant 0 : i32
    return %arg0, %c0_i32 : i32, i32
  }
  func.func @transform_1(%arg0: i32) -> (i32, i32) {
    %c0_i32 = arith.constant 0 : i32
    %c0_i32_0 = arith.constant 0 : i32
    %c0_i32_1 = arith.constant 0 : i32
    return %c0_i32, %c0_i32_0 : i32, i32
  }
  func.func @transform_2(%arg0: i32) -> (i32, i32) {
    %c0_i32 = arith.constant 0 : i32
    %c0_i32_0 = arith.constant 0 : i32
    return %arg0, %c0_i32 : i32, i32
  }
  func.func @transform_3(%arg0: i32) -> (i32, i32) {
    %c0_i32 = arith.constant 0 : i32
    %c0_i32_0 = arith.constant 0 : i32
    %c0_i32_1 = arith.constant 0 : i32
    return %c0_i32, %c0_i32_0 : i32, i32
  }
  func.func @transform_4(%arg0: i32) -> (i32, i32) {
    %c0_i32 = arith.constant 0 : i32
    %c0_i32_0 = arith.constant 0 : i32
    return %arg0, %c0_i32 : i32, i32
  }
}

</mosaic_0001>

<llo_original>
// kernel: tpu_custom_call.1
$region0: #{tpu_custom_call.1}
  #allocation0 [shape = 'u32[]', space=smem, size = 0x4, offset = 0x4, fixed_abs, tag = 'smem constant byte address 0x4 - core index']
  #allocation1 [shape = 'u32[144,128]{1,0:T(1,128)}', space=vmem, size = 0x12000, scoped, tag = 'internal scratch']
  %s0 = inlined_call_operand.vmem [shape: bf16[256,128], index: 0, kind: input, shape index: {}]
  %s1 = inlined_call_operand.vmem [shape: bf16[128,128], index: 1, kind: input, shape index: {}]
  %s2 = inlined_call_operand.vmem [shape: f32[256,1], index: 2, kind: input, shape index: {}]
  %s3 = inlined_call_operand.vmem [shape: f32[1,128], index: 3, kind: input, shape index: {}]
  %s4 = inlined_call_operand.hbm [shape: bf16[256,128], index: 4, kind: output, shape index: {}]
  %s5 = sld [smem:[#allocation0]]
  $region49: #{tpu_custom_call.1} parent=0
    _
  %s7 = ssub.s32 1, %s5
  %s8 = scalar_select 0, %s7, %s5
  $region1: #{tpu_custom_call.1} parent=0
    #allocation2 [shape = 'u8[65536]{0}', space=vmem, size = 0x10000, scoped, tag = 'output window, operand 0']
    #allocation3 [shape = 's32[2]{0}', space=sflag, size = 0x8, scoped, tag = 'scoped memory for tpu_custom_call.1']
    %9 = vsyncpa [#allocation3], 0
    %s10 = scalar_lea.sflag [#allocation3], 1
    %11 = vsyncpa %s10, 0
    loop: start=0, step=1, limit=4
    $region2: #{tpu_custom_call.1} parent=1 // loop_pre_header
      _
    $region3: #{tpu_custom_call.1} parent=1 // loop_header
      %s13 = sphi 0, %s17
      %p14 = scmp.ge.s32.totalorder %s13, 4
      %s23 = sphi 0, %s25
      %s26 = sphi 0, %s23
      %s27 = sphi 0, %s26
      %s43 = sphi 0, %s27
      %s47 = sphi 0, %s47
      %s49 = sphi 0, %s47
      %s50 = sphi 0, %s49
      %s64 = sphi 0, %s50
      %s70 = sphi 0, %s72
      %s73 = sphi 0, %s70
      %s74 = sphi 0, %s73
      %s90 = sphi 0, %s74
      %s94 = sphi 0, %s94
      %s96 = sphi 0, %s94
      %s97 = sphi 0, %s96
      %s111 = sphi 0, %s97
      %s117 = sphi 0, %s119
      %s120 = sphi 0, %s117
      %s121 = sphi 0, %s120
      %s137 = sphi 0, %s121
    $region4: #{tpu_custom_call.1} parent=1 // loop_header_branch
      %16 = sbr.rel (%p14) target = $region8
    $region5: #{tpu_custom_call.1} parent=1 // loop_body
      %s18 = ssub.s32 %s13, 1
      %s19 = ssub.s32 %s13, 2
      %s20 = sadd.s32 %s13, 1
      %s21 = ssub.s32 %s13, %s20
      %p22 = scmp.eq.s32.totalorder %s21, 0
      %s24 = sadd.s32 %s23, 1
      %s25 = scalar_select %p22, %s23, %s24
      %p28 = pneg %p22
      %p29 = scmp.eq.s32.totalorder %s13, 1
      %p30 = por %p28, %p29
      %p31 = scmp.ne.s32.totalorder %s23, %s26
      %p32 = scmp.eq.s32.totalorder %s13, 0
      %p33 = por %p31, %p32
      %p34 = scmp.ne.s32.totalorder %s23, %s26
      %p35 = scmp.eq.s32.totalorder %s18, 1
      %p36 = por %p34, %p35
      %p37 = scmp.ne.s32.totalorder %s26, %s27
      %p38 = scmp.eq.s32.totalorder %s18, 0
      %p39 = por %p37, %p38
      %p40 = scmp.ne.s32.totalorder %s26, %s27
      %p41 = scmp.eq.s32.totalorder %s19, 1
      %p42 = por %p40, %p41
      %p44 = scmp.ne.s32.totalorder %s27, %s43
      %p45 = scmp.eq.s32.totalorder %s19, 0
      %p46 = por %p44, %p45
      %s48 = sadd.s32 %s47, 1
      %p51 = scmp.eq.s32.totalorder %s13, 1
      %p52 = scmp.ne.s32.totalorder %s47, %s49
      %p53 = scmp.eq.s32.totalorder %s13, 0
      %p54 = por %p52, %p53
      %p55 = scmp.ne.s32.totalorder %s47, %s49
      %p56 = scmp.eq.s32.totalorder %s18, 1
      %p57 = por %p55, %p56
      %p58 = scmp.ne.s32.totalorder %s49, %s50
      %p59 = scmp.eq.s32.totalorder %s18, 0
      %p60 = por %p58, %p59
      %p61 = scmp.ne.s32.totalorder %s49, %s50
      %p62 = scmp.eq.s32.totalorder %s19, 1
      %p63 = por %p61, %p62
      %p65 = scmp.ne.s32.totalorder %s50, %s64
      %p66 = scmp.eq.s32.totalorder %s19, 0
      %p67 = por %p65, %p66
      %s68 = ssub.s32 %s13, %s20
      %p69 = scmp.eq.s32.totalorder %s68, 0
      %s71 = sadd.s32 %s70, 1
      %s72 = scalar_select %p69, %s70, %s71
      %p75 = pneg %p69
      %p76 = scmp.eq.s32.totalorder %s13, 1
      %p77 = por %p75, %p76
      %p78 = scmp.ne.s32.totalorder %s70, %s73
      %p79 = scmp.eq.s32.totalorder %s13, 0
      %p80 = por %p78, %p79
      %p81 = scmp.ne.s32.totalorder %s70, %s73
      %p82 = scmp.eq.s32.totalorder %s18, 1
      %p83 = por %p81, %p82
      %p84 = scmp.ne.s32.totalorder %s73, %s74
      %p85 = scmp.eq.s32.totalorder %s18, 0
      %p86 = por %p84, %p85
      %p87 = scmp.ne.s32.totalorder %s73, %s74
      %p88 = scmp.eq.s32.totalorder %s19, 1
      %p89 = por %p87, %p88
      %p91 = scmp.ne.s32.totalorder %s74, %s90
      %p92 = scmp.eq.s32.totalorder %s19, 0
      %p93 = por %p91, %p92
      %s95 = sadd.s32 %s94, 1
      %p98 = scmp.eq.s32.totalorder %s13, 1
      %p99 = scmp.ne.s32.totalorder %s94, %s96
      %p100 = scmp.eq.s32.totalorder %s13, 0
      %p101 = por %p99, %p100
      %p102 = scmp.ne.s32.totalorder %s94, %s96
      %p103 = scmp.eq.s32.totalorder %s18, 1
      %p104 = por %p102, %p103
      %p105 = scmp.ne.s32.totalorder %s96, %s97
      %p106 = scmp.eq.s32.totalorder %s18, 0
      %p107 = por %p105, %p106
      %p108 = scmp.ne.s32.totalorder %s96, %s97
      %p109 = scmp.eq.s32.totalorder %s19, 1
      %p110 = por %p108, %p109
      %p112 = scmp.ne.s32.totalorder %s97, %s111
      %p113 = scmp.eq.s32.totalorder %s19, 0
      %p114 = por %p112, %p113
      %s115 = ssub.s32 %s13, %s20
      %p116 = scmp.eq.s32.totalorder %s115, 0
      %s118 = sadd.s32 %s117, 1
      %s119 = scalar_select %p116, %s117, %s118
      %p122 = pneg %p116
      %p123 = scmp.eq.s32.totalorder %s13, 1
      %p124 = por %p122, %p123
      %p125 = scmp.ne.s32.totalorder %s117, %s120
      %p126 = scmp.eq.s32.totalorder %s13, 0
      %p127 = por %p125, %p126
      %p128 = scmp.ne.s32.totalorder %s117, %s120
      %p129 = scmp.eq.s32.totalorder %s18, 1
      %p130 = por %p128, %p129
      %p131 = scmp.ne.s32.totalorder %s120, %s121
      %p132 = scmp.eq.s32.totalorder %s18, 0
      %p133 = por %p131, %p132
      %p134 = scmp.ne.s32.totalorder %s120, %s121
      %p135 = scmp.eq.s32.totalorder %s19, 1
      %p136 = por %p134, %p135
      %p138 = scmp.ne.s32.totalorder %s121, %s137
      %p139 = scmp.eq.s32.totalorder %s19, 0
      %p140 = por %p138, %p139
      %p141 = scmp.le.s32.totalorder 1, %s13
      %p142 = scmp.lt.s32.totalorder %s13, 3
      %p143 = pnand %p141, %p142
      %p144 = pneg %p143
      // Predicated region
      $region9: #{tpu_custom_call.1} parent=5 // pred_check
        _
      $region10: #{tpu_custom_call.1} parent=5 // pred_check_branch
        %146 = sbr.rel (%p143) target = $region12
      $region11: #{tpu_custom_call.1} parent=5 // pred_region
        %s147 = ssub.s32 %s13, 1
        // Predicated region
        $region13: #{tpu_custom_call.1} parent=11 // pred_check
          %p148 = pneg %p60
        $region14: #{tpu_custom_call.1} parent=11 // pred_check_branch
          %150 = sbr.rel (%p148) target = $region16
        $region15: #{tpu_custom_call.1} parent=11 // pred_region
          _
        $region16: #{tpu_custom_call.1} parent=11 // pred_fallthru
          _
        // Predicated region
        $region17: #{tpu_custom_call.1} parent=11 // pred_check
          %p151 = pneg %p107
        $region18: #{tpu_custom_call.1} parent=11 // pred_check_branch
          %153 = sbr.rel (%p151) target = $region20
        $region19: #{tpu_custom_call.1} parent=11 // pred_region
          _
        $region20: #{tpu_custom_call.1} parent=11 // pred_fallthru
          _
      $region12: #{tpu_custom_call.1} parent=5 // pred_fallthru
        _
      %p154 = scmp.lt.s32.totalorder %s13, 2
      // Predicated region
      $region21: #{tpu_custom_call.1} parent=5 // pred_check
        %p155 = pneg %p154
      $region22: #{tpu_custom_call.1} parent=5 // pred_check_branch
        %157 = sbr.rel (%p155) target = $region24
      $region23: #{tpu_custom_call.1} parent=5 // pred_region
        // Predicated region
        $region25: #{tpu_custom_call.1} parent=23 // pred_check
          %p158 = pneg %p33
        $region26: #{tpu_custom_call.1} parent=23 // pred_check_branch
          %160 = sbr.rel (%p158) target = $region28
        $region27: #{tpu_custom_call.1} parent=23 // pred_region
          %s161 = smul.u32 16, %s13
          %p162 = scmp.lt.s32.totalorder %s161, 31
          %s163 = scalar_select %p162, %s161, 31
          %s164 = smul.addr %s163, 4
          %s165 = scalar_lea.vmem %s0, %s164
          %s166 = smul.u32 16, %s13
        $region28: #{tpu_custom_call.1} parent=23 // pred_fallthru
          _
        // Predicated region
        $region29: #{tpu_custom_call.1} parent=23 // pred_check
          %p167 = pneg %p80
        $region30: #{tpu_custom_call.1} parent=23 // pred_check_branch
          %169 = sbr.rel (%p167) target = $region32
        $region31: #{tpu_custom_call.1} parent=23 // pred_region
          %s170 = smul.u32 16, %s13
          %p171 = scmp.lt.s32.totalorder %s170, 31
          %s172 = scalar_select %p171, %s170, 31
          %s173 = smul.addr %s172, 8
          %s174 = scalar_lea.vmem %s2, %s173
          %s175 = smul.u32 16, %s13
        $region32: #{tpu_custom_call.1} parent=23 // pred_fallthru
          _
      $region24: #{tpu_custom_call.1} parent=5 // pred_fallthru
        _
      %p176 = scmp.le.s32.totalorder 1, %s13
      %p177 = scmp.lt.s32.totalorder %s13, 3
      %p178 = pnand %p176, %p177
      %p179 = pneg %p178
      // Predicated region
      $region33: #{tpu_custom_call.1} parent=5 // pred_check
        _
      $region34: #{tpu_custom_call.1} parent=5 // pred_check_branch
        %181 = sbr.rel (%p178) target = $region36
      $region35: #{tpu_custom_call.1} parent=5 // pred_region
        %s182 = ssub.s32 %s13, 1
        %s183 = smul.u32 16, %s18
        %p184 = scmp.lt.s32.totalorder %s183, 31
        %s185 = scalar_select %p184, %s183, 31
        %s186 = smul.addr %s185, 4
        %s187 = scalar_lea.vmem %s0, %s186
        %p188 = pneg %p39
        %p189 = pneg %p36
        %p190 = pneg %p60
        %p191 = pneg %p57
        %s192 = smul.u32 16, %s18
        %p193 = scmp.lt.s32.totalorder %s192, 31
        %s194 = scalar_select %p193, %s192, 31
        %s195 = smul.addr %s194, 8
        %s196 = scalar_lea.vmem %s2, %s195
        %p197 = pneg %p86
        %p198 = pneg %p83
        %p199 = pneg %p107
        %p200 = pneg %p104
        %p201 = pneg %p133
        %p202 = pneg %p130
        %s203 = sand.u32 %s120, 1
        %s204 = scalar_lea.sflag [#allocation3], %s203
        %s205 = sand.u32 %s120, 1
        %s206 = smul.addr %s205, 64
        %s207 = scalar_lea.vmem [#allocation2], %s206
        %s208 = smul.u32 16, %s18
        %p209 = scmp.lt.s32.totalorder %s208, 31
        %s210 = scalar_select %p209, %s208, 31
        %s211 = smul.addr %s210, 4
        %s212 = scalar_lea.vmem %s0, %s211
        %s213 = smul.u32 16, %s18
        %s214 = smul.u32 16, %s18
        %p215 = scmp.lt.s32.totalorder %s214, 31
        %s216 = scalar_select %p215, %s214, 31
        %s217 = smul.addr %s216, 8
        %s218 = scalar_lea.vmem %s2, %s217
        %s219 = smul.u32 16, %s18
        %s220 = smul.u32 16, %s18
        %v222 = vld [vmem:[%s212] sm:$0xf]
        %v223 = vld [vmem:[%s212 + $0x4] sm:$0xf]
        %v224 = vld [vmem:[%s212 + $0x8] sm:$0xf]
        %v225 = vld [vmem:[%s212 + $0xc] sm:$0xf]
        %v226 = vld [vmem:[%s212 + $0x10] sm:$0xf]
        %v227 = vld [vmem:[%s212 + $0x14] sm:$0xf]
        %v228 = vld [vmem:[%s212 + $0x18] sm:$0xf]
        %v229 = vld [vmem:[%s212 + $0x1c] sm:$0xf]
        %v230 = vld [vmem:[%s212 + $0x20] sm:$0xf]
        %v231 = vld [vmem:[%s212 + $0x24] sm:$0xf]
        %v232 = vld [vmem:[%s212 + $0x28] sm:$0xf]
        %v233 = vld [vmem:[%s212 + $0x2c] sm:$0xf]
        %v234 = vld [vmem:[%s212 + $0x30] sm:$0xf]
        %v235 = vld [vmem:[%s212 + $0x34] sm:$0xf]
        %v236 = vld [vmem:[%s212 + $0x38] sm:$0xf]
        %v237 = vld [vmem:[%s212 + $0x3c] sm:$0xf]
        %v238 = vld [vmem:[%s1] sm:$0xf]
        %v239 = vld [vmem:[%s1 + $0x4] sm:$0xf]
        %v240 = vld [vmem:[%s1 + $0x8] sm:$0xf]
        %v241 = vld [vmem:[%s1 + $0xc] sm:$0xf]
        %v242 = vld [vmem:[%s1 + $0x10] sm:$0xf]
        %v243 = vld [vmem:[%s1 + $0x14] sm:$0xf]
        %v244 = vld [vmem:[%s1 + $0x18] sm:$0xf]
        %v245 = vld [vmem:[%s1 + $0x1c] sm:$0xf]
        %v246 = vld [vmem:[%s1 + $0x20] sm:$0xf]
        %v247 = vld [vmem:[%s1 + $0x24] sm:$0xf]
        %v248 = vld [vmem:[%s1 + $0x28] sm:$0xf]
        %v249 = vld [vmem:[%s1 + $0x2c] sm:$0xf]
        %v250 = vld [vmem:[%s1 + $0x30] sm:$0xf]
        %v251 = vld [vmem:[%s1 + $0x34] sm:$0xf]
        %v252 = vld [vmem:[%s1 + $0x38] sm:$0xf]
        %v253 = vld [vmem:[%s1 + $0x3c] sm:$0xf]
        %v270 = vunpack.c.l.b16 %v222
        %v271 = vunpack.c.l.b16 %v223
        %v272 = vunpack.c.l.b16 %v224
        %v273 = vunpack.c.l.b16 %v225
        %v274 = vunpack.c.l.b16 %v226
        %v275 = vunpack.c.l.b16 %v227
        %v276 = vunpack.c.l.b16 %v228
        %v277 = vunpack.c.l.b16 %v229
        %v278 = vunpack.c.l.b16 %v230
        %v279 = vunpack.c.l.b16 %v231
        %v280 = vunpack.c.l.b16 %v232
        %v281 = vunpack.c.l.b16 %v233
        %v282 = vunpack.c.l.b16 %v234
        %v283 = vunpack.c.l.b16 %v235
        %v284 = vunpack.c.l.b16 %v236
        %v285 = vunpack.c.l.b16 %v237
        %v286 = vpack.c.b16 %v271, %v270
        %v287 = vpack.c.b16 %v273, %v272
        %v288 = vpack.c.b16 %v275, %v274
        %v289 = vpack.c.b16 %v277, %v276
        %v290 = vpack.c.b16 %v279, %v278
        %v291 = vpack.c.b16 %v281, %v280
        %v292 = vpack.c.b16 %v283, %v282
        %v293 = vpack.c.b16 %v285, %v284
        %v318 = vunpack.c.l.b16 %v238
        %v319 = vunpack.c.l.b16 %v239
        %v320 = vunpack.c.l.b16 %v240
        %v321 = vunpack.c.l.b16 %v241
        %v322 = vunpack.c.l.b16 %v242
        %v323 = vunpack.c.l.b16 %v243
        %v324 = vunpack.c.l.b16 %v244
        %v325 = vunpack.c.l.b16 %v245
        %v326 = vunpack.c.l.b16 %v246
        %v327 = vunpack.c.l.b16 %v247
        %v328 = vunpack.c.l.b16 %v248
        %v329 = vunpack.c.l.b16 %v249
        %v330 = vunpack.c.l.b16 %v250
        %v331 = vunpack.c.l.b16 %v251
        %v332 = vunpack.c.l.b16 %v252
        %v333 = vunpack.c.l.b16 %v253
        %v334 = vpack.c.b16 %v319, %v318
        %v335 = vpack.c.b16 %v321, %v320
        %v336 = vpack.c.b16 %v323, %v322
        %v337 = vpack.c.b16 %v325, %v324
        %v338 = vpack.c.b16 %v327, %v326
        %v339 = vpack.c.b16 %v329, %v328
        %v340 = vpack.c.b16 %v331, %v330
        %v341 = vpack.c.b16 %v333, %v332
        %350 = vmatprep.subr.bf16.mxu0 0
        %351 = vmatpush1.bf16.msra.mxu0 %v341
        %352 = vmatprep.subr.bf16.mxu0 0
        %353 = vmatpush1.bf16.msra.mxu0 %v340
        %354 = vmatprep.subr.bf16.mxu0 0
        %355 = vmatpush1.bf16.msra.mxu0 %v339
        %356 = vmatprep.subr.bf16.mxu0 0
        %357 = vmatpush1.bf16.msra.mxu0 %v338
        %358 = vmatprep.subr.bf16.mxu0 0
        %359 = vmatpush1.bf16.msra.mxu0 %v337
        %360 = vmatprep.subr.bf16.mxu0 0
        %361 = vmatpush1.bf16.msra.mxu0 %v336
        %362 = vmatprep.subr.bf16.mxu0 0
        %363 = vmatpush1.bf16.msra.mxu0 %v335
        %364 = vmatprep.subr.bf16.mxu0 0
        %365 = vmatpush1.bf16.msra.mxu0 %v334
        %366 = vmatprep.subr.bf16.mxu0 0
        %367 = vmatpush2.bf16.msra.mxu0 0
        %368 = vmatprep.subr.bf16.mxu0 0
        %369 = vmatpush2.bf16.msra.mxu0 0
        %370 = vmatprep.subr.bf16.mxu0 0
        %371 = vmatpush2.bf16.msra.mxu0 0
        %372 = vmatprep.subr.bf16.mxu0 0
        %373 = vmatpush2.bf16.msra.mxu0 0
        %374 = vmatprep.subr.bf16.mxu0 0
        %375 = vmatpush2.bf16.msra.mxu0 0
        %376 = vmatprep.subr.bf16.mxu0 0
        %377 = vmatpush2.bf16.msra.mxu0 0
        %378 = vmatprep.subr.bf16.mxu0 0
        %379 = vmatpush2.bf16.msra.mxu0 0
        %380 = vmatprep.subr.bf16.mxu0 0
        %381 = vmatpush2.bf16.msra.mxu0 0
        %382 = vmatprep.mubr.bf16.mxu0 0
        %383 = vmatmul.mubr.bf16.gmra.mxu0 %v286
        %v384 = vpop.f32.mrf.mxu0
        %v385 = vadd.f32 0.0, %v384
        %v386 = vpop.f32.mrf.mxu0
        %v387 = vpop.f32.mrf.mxu0
        %v388 = vadd.f32 0.0, %v387
        %v389 = vpop.f32.mrf.mxu0
        %390 = vmatprep.mubr.bf16.mxu0 0
        %391 = vmatmul.mubr.bf16.gmra.mxu0 %v287
        %v392 = vpop.f32.mrf.mxu0
        %v393 = vadd.f32 0.0, %v392
        %v394 = vpop.f32.mrf.mxu0
        %v395 = vpop.f32.mrf.mxu0
        %v396 = vadd.f32 0.0, %v395
        %v397 = vpop.f32.mrf.mxu0
        %398 = vmatprep.mubr.bf16.mxu0 0
        %399 = vmatmul.mubr.bf16.gmra.mxu0 %v288
        %v400 = vpop.f32.mrf.mxu0
        %v401 = vadd.f32 0.0, %v400
        %v402 = vpop.f32.mrf.mxu0
        %v403 = vpop.f32.mrf.mxu0
        %v404 = vadd.f32 0.0, %v403
        %v405 = vpop.f32.mrf.mxu0
        %406 = vmatprep.mubr.bf16.mxu0 0
        %407 = vmatmul.mubr.bf16.gmra.mxu0 %v289
        %v408 = vpop.f32.mrf.mxu0
        %v409 = vadd.f32 0.0, %v408
        %v410 = vpop.f32.mrf.mxu0
        %v411 = vpop.f32.mrf.mxu0
        %v412 = vadd.f32 0.0, %v411
        %v413 = vpop.f32.mrf.mxu0
        %414 = vmatprep.mubr.bf16.mxu0 0
        %415 = vmatmul.mubr.bf16.gmra.mxu0 %v290
        %v416 = vpop.f32.mrf.mxu0
        %v417 = vadd.f32 0.0, %v416
        %v418 = vpop.f32.mrf.mxu0
        %v419 = vpop.f32.mrf.mxu0
        %v420 = vadd.f32 0.0, %v419
        %v421 = vpop.f32.mrf.mxu0
        %422 = vmatprep.mubr.bf16.mxu0 0
        %423 = vmatmul.mubr.bf16.gmra.mxu0 %v291
        %v424 = vpop.f32.mrf.mxu0
        %v425 = vadd.f32 0.0, %v424
        %v426 = vpop.f32.mrf.mxu0
        %v427 = vpop.f32.mrf.mxu0
        %v428 = vadd.f32 0.0, %v427
        %v429 = vpop.f32.mrf.mxu0
        %430 = vmatprep.mubr.bf16.mxu0 0
        %431 = vmatmul.mubr.bf16.gmra.mxu0 %v292
        %v432 = vpop.f32.mrf.mxu0
        %v433 = vadd.f32 0.0, %v432
        %v434 = vpop.f32.mrf.mxu0
        %v435 = vpop.f32.mrf.mxu0
        %v436 = vadd.f32 0.0, %v435
        %v437 = vpop.f32.mrf.mxu0
        %438 = vmatprep.mubr.bf16.mxu0 0
        %439 = vmatmul.mubr.bf16.gmra.mxu0 %v293
        %v440 = vpop.f32.mrf.mxu0
        %v441 = vadd.f32 0.0, %v440
        %v442 = vpop.f32.mrf.mxu0
        %v443 = vpop.f32.mrf.mxu0
        %v444 = vadd.f32 0.0, %v443
        %v445 = vpop.f32.mrf.mxu0
        %446 = vdwg.mxu0
        %v447 = vpack.c.bf16 %v388, %v385
        %v448 = vpack.c.bf16 %v396, %v393
        %v449 = vpack.c.bf16 %v404, %v401
        %v450 = vpack.c.bf16 %v412, %v409
        %v451 = vpack.c.bf16 %v420, %v417
        %v452 = vpack.c.bf16 %v428, %v425
        %v453 = vpack.c.bf16 %v436, %v433
        %v454 = vpack.c.bf16 %v444, %v441
        %v463 = vunpack.c.l.b16 %v447
        %v464 = vunpack.c.h.b16 %v447
        %v465 = vunpack.c.l.b16 %v448
        %v466 = vunpack.c.h.b16 %v448
        %v467 = vunpack.c.l.b16 %v449
        %v468 = vunpack.c.h.b16 %v449
        %v469 = vunpack.c.l.b16 %v450
        %v470 = vunpack.c.h.b16 %v450
        %v471 = vunpack.c.l.b16 %v451
        %v472 = vunpack.c.h.b16 %v451
        %v473 = vunpack.c.l.b16 %v452
        %v474 = vunpack.c.h.b16 %v452
        %v475 = vunpack.c.l.b16 %v453
        %v476 = vunpack.c.h.b16 %v453
        %v477 = vunpack.c.l.b16 %v454
        %v478 = vunpack.c.h.b16 %v454
        %v479 = vpack.c.b16 %v463, %v463
        %v480 = vpack.c.b16 %v464, %v464
        %v481 = vpack.c.b16 %v465, %v465
        %v482 = vpack.c.b16 %v466, %v466
        %v483 = vpack.c.b16 %v467, %v467
        %v484 = vpack.c.b16 %v468, %v468
        %v485 = vpack.c.b16 %v469, %v469
        %v486 = vpack.c.b16 %v470, %v470
        %v487 = vpack.c.b16 %v471, %v471
        %v488 = vpack.c.b16 %v472, %v472
        %v489 = vpack.c.b16 %v473, %v473
        %v490 = vpack.c.b16 %v474, %v474
        %v491 = vpack.c.b16 %v475, %v475
        %v492 = vpack.c.b16 %v476, %v476
        %v493 = vpack.c.b16 %v477, %v477
        %v494 = vpack.c.b16 %v478, %v478
        %511 = vst [vmem:[%s207] sm:$0xf] %v479
        %512 = vst [vmem:[%s207 + $0x4] sm:$0xf] %v480
        %513 = vst [vmem:[%s207 + $0x8] sm:$0xf] %v481
        %514 = vst [vmem:[%s207 + $0xc] sm:$0xf] %v482
        %515 = vst [vmem:[%s207 + $0x10] sm:$0xf] %v483
        %516 = vst [vmem:[%s207 + $0x14] sm:$0xf] %v484
        %517 = vst [vmem:[%s207 + $0x18] sm:$0xf] %v485
        %518 = vst [vmem:[%s207 + $0x1c] sm:$0xf] %v486
        %519 = vst [vmem:[%s207 + $0x20] sm:$0xf] %v487
        %520 = vst [vmem:[%s207 + $0x24] sm:$0xf] %v488
        %521 = vst [vmem:[%s207 + $0x28] sm:$0xf] %v489
        %522 = vst [vmem:[%s207 + $0x2c] sm:$0xf] %v490
        %523 = vst [vmem:[%s207 + $0x30] sm:$0xf] %v491
        %524 = vst [vmem:[%s207 + $0x34] sm:$0xf] %v492
        %525 = vst [vmem:[%s207 + $0x38] sm:$0xf] %v493
        %526 = vst [vmem:[%s207 + $0x3c] sm:$0xf] %v494
        %s527 = sand.u32 %s120, 1
        %s528 = scalar_lea.sflag [#allocation3], %s527
        %s529 = sand.u32 %s120, 1
        %s530 = smul.addr %s529, 64
        %s531 = scalar_lea.vmem [#allocation2], %s530
        // Predicated region
        $region37: #{tpu_custom_call.1} parent=35 // pred_check
          %p532 = pneg %p130
        $region38: #{tpu_custom_call.1} parent=35 // pred_check_branch
          %534 = sbr.rel (%p532) target = $region40
        $region39: #{tpu_custom_call.1} parent=35 // pred_region
          %s535 = smul.u32 16, %s18
          %s537 = ssub.s32 1024, 1024
          %538 = vsyncadd %s528, %s537
          %s539 = smul.addr %s535, 64
          %s540 = scalar_lea.hbm %s4, %s539
          %s541 = sshll.u32 %s531, 4
          %s542 = int_to_ptr.vmem [resolvable:$true] %s541
          %547 = dma.vmem_to_hbm [thread:$0]  %s542, 1024, %s540, %s528, 64, 64, 4
        $region40: #{tpu_custom_call.1} parent=35 // pred_fallthru
          _
      $region36: #{tpu_custom_call.1} parent=5 // pred_fallthru
        _
      %p548 = scmp.le.s32.totalorder 2, %s13
      // Predicated region
      $region41: #{tpu_custom_call.1} parent=5 // pred_check
        %p549 = pneg %p548
      $region42: #{tpu_custom_call.1} parent=5 // pred_check_branch
        %551 = sbr.rel (%p549) target = $region44
      $region43: #{tpu_custom_call.1} parent=5 // pred_region
        %s552 = ssub.s32 %s13, 2
        // Predicated region
        $region45: #{tpu_custom_call.1} parent=43 // pred_check
          %p553 = pneg %p136
        $region46: #{tpu_custom_call.1} parent=43 // pred_check_branch
          %555 = sbr.rel (%p553) target = $region48
        $region47: #{tpu_custom_call.1} parent=43 // pred_region
          %s556 = sand.u32 %s121, 1
          %s557 = scalar_lea.sflag [#allocation3], %s556
          %s558 = sand.u32 %s121, 1
          %s559 = smul.addr %s558, 64
          %s560 = scalar_lea.vmem [#allocation2], %s559
          %561 = dma.done %s557, 1024
        $region48: #{tpu_custom_call.1} parent=43 // pred_fallthru
          _
      $region44: #{tpu_custom_call.1} parent=5 // pred_fallthru
        _
    $region6: #{tpu_custom_call.1} parent=1 // loop_footer
      %s17 = sadd.s32 1, %s13
    $region7: #{tpu_custom_call.1} parent=1 // loop_footer_branch
      %12 = sbr.rel target = $region3
    $region8: #{tpu_custom_call.1} parent=1 // loop_exit
      _
    %562 = vsyncpa [#allocation3], 1
    %s563 = scalar_lea.sflag [#allocation3], 1
    %564 = vsyncpa %s563, 1

</llo_original>
